<compile_context>
chip_gen: v6e
topology: v6e:2x2x1
jax: 0.10.0
libtpu: 0.0.40
codegen_flags: <defaults>
</compile_context>

<pallas_src>
import jax
import jax.numpy as jnp
from jax import lax
from jax.experimental import pallas as pl
from jax.experimental.pallas import tpu as pltpu


LANE = 128
EPS = 1e-5


def _round_up(n, m):
    return ((n + m - 1) // m) * m


def _vmem_budget_bytes():
    """Per-generation VMEM budget (~70% of capacity), safe fallback 32 MiB."""
    try:
        info = pltpu.get_tpu_info()
        cap = getattr(info, "vmem_capacity_bytes", None)
        if cap:
            return min(int(0.70 * int(cap)), 96 * 1024 * 1024)
    except Exception:
        pass
    return 32 * 1024 * 1024


# ---------------------------------------------------------------------------
# Parameter prep (hoisted out of the per-call path -- run once).
# ---------------------------------------------------------------------------
def prepare_params(params):
    in_dim, n_h1 = params["w1"].shape
    n_h2 = params["w2"].shape[1]
    out_dim = params["w3"].shape[1]
    h1_p = _round_up(n_h1, LANE)
    h2_p = _round_up(n_h2, LANE)
    out_p = _round_up(out_dim, LANE)

    def pad2(a, rows, cols, fill=0.0):
        return jnp.pad(a, ((0, rows - a.shape[0]), (0, cols - a.shape[1])),
                       constant_values=fill)

    # gamma pads with 1.0 / beta with 0.0 so padded feature lanes stay exactly 0
    # through BN+ReLU and contribute nothing to the next matmul.
    # NOTE: b1/b2 are intentionally dropped -- they cancel under batch-mean subtraction.
    return {
        "in_dim": in_dim, "h1": n_h1, "h2": n_h2, "out_dim": out_dim,
        "h1_p": h1_p, "h2_p": h2_p, "out_p": out_p,
        "w1": pad2(params["w1"], in_dim, h1_p).astype(jnp.bfloat16),
        "w2": pad2(params["w2"], h1_p, h2_p).astype(jnp.bfloat16),
        "w3": pad2(params["w3"], h2_p, out_p).astype(jnp.bfloat16),
        "g1": pad2(params["g1"], 1, h1_p, 1.0),
        "be1": pad2(params["be1"], 1, h1_p, 0.0),
        "g2": pad2(params["g2"], 1, h2_p, 1.0),
        "be2": pad2(params["be2"], 1, h2_p, 0.0),
        "b3": pad2(params["b3"], 1, out_p, 0.0),
    }


# ---------------------------------------------------------------------------
# Fused single-block path (small / medium batches): everything in VMEM at once.
# ---------------------------------------------------------------------------
def _make_fused_kernel(true_b, b_pad):
    inv_b = 1.0 / float(true_b)
    need_mask = b_pad != true_b

    def kernel(x_ref, w1_ref, g1_ref, be1_ref, w2_ref, g2_ref, be2_ref,
               w3_ref, b3_ref, o_ref):
        if need_mask:
            row_ok = lax.broadcasted_iota(jnp.int32, (b_pad, 1), 0) < true_b

        def bn_relu(z, g_ref, be_ref):
            # Single-pass batch statistics (padded rows are exactly zero, so they
            # contribute nothing; inv_b uses the true batch size).
            mu = jnp.sum(z, axis=0, keepdims=True) * inv_b
            ex2 = jnp.sum(z * z, axis=0, keepdims=True) * inv_b
            var = jnp.maximum(ex2 - mu * mu, 0.0)          # biased variance (BN fwd)
            scale = g_ref[...] * lax.rsqrt(var + EPS)      # gamma / sqrt(var+eps)
            shift = be_ref[...] - mu * scale               # beta - mu * scale
            h = jnp.maximum(z * scale + shift, 0.0)
            if need_mask:
                h = jnp.where(row_ok, h, 0.0)              # keep padded rows zero
            return h

        x = x_ref[...].astype(jnp.bfloat16)                # bf16 cast in-kernel

        z1 = jnp.dot(x, w1_ref[...], preferred_element_type=jnp.float32)
        h1 = bn_relu(z1, g1_ref, be1_ref).astype(jnp.bfloat16)

        z2 = jnp.dot(h1, w2_ref[...], preferred_element_type=jnp.float32)
        h2 = bn_relu(z2, g2_ref, be2_ref).astype(jnp.bfloat16)

        z3 = jnp.dot(h2, w3_ref[...], preferred_element_type=jnp.float32) + b3_ref[...]
        o_ref[...] = z3.astype(o_ref.dtype)

    return kernel


def _fused_forward(x, p, budget):
    B = x.shape[0]
    b_pad = _round_up(B, 8)
    if b_pad != B:
        x = jnp.pad(x, ((0, b_pad - B), (0, 0)))

    args = (x, p["w1"], p["g1"], p["be1"], p["w2"], p["g2"], p["be2"],
            p["w3"], p["b3"])

    vmem_spec = pl.BlockSpec(memory_space=pltpu.MemorySpace.VMEM)
    y = pl.pallas_call(
        _make_fused_kernel(B, b_pad),
        out_shape=jax.ShapeDtypeStruct((b_pad, p["out_p"]), jnp.float32),
        in_specs=[vmem_spec] * len(args),
        out_specs=vmem_spec,
        compiler_params=pltpu.CompilerParams(vmem_limit_bytes=budget),
    )(*args)
    return y[:B, :p["out_dim"]]


# ---------------------------------------------------------------------------
# Batch-tiled two-phase BatchNorm path (large batches): 3 pipelined pallas_calls.
# ---------------------------------------------------------------------------
def _tiled_forward(x, p, budget):
    B, in_dim = x.shape
    h1_p, h2_p, out_p = p["h1_p"], p["h2_p"], p["out_p"]

    TM = 256 if B >= 256 else _round_up(B, 8)   # one MXU pass wide on v6e/v7x
    b_pad = _round_up(B, TM)
    if b_pad != B:
        x = jnp.pad(x, ((0, b_pad - B), (0, 0)))
    n_tiles = b_pad // TM

    inv_b = 1.0 / float(B)
    need_mask = b_pad != B

    def scale_shift(stats_ref, g_ref, be_ref):
        mu = stats_ref[0:1, :] * inv_b
        ex2 = stats_ref[1:2, :] * inv_b
        var = jnp.maximum(ex2 - mu * mu, 0.0)
        scale = g_ref[...] * lax.rsqrt(var + EPS)
        shift = be_ref[...] - mu * scale
        return scale, shift

    # ---- pass 1: z1 = x @ w1 per tile; accumulate per-feature sum / sum-sq ----
    def pass1(x_ref, w1_ref, z1_ref, s1_ref):
        @pl.when(pl.program_id(0) == 0)
        def _():
            s1_ref[...] = jnp.zeros_like(s1_ref)
        z1 = jnp.dot(x_ref[...].astype(jnp.bfloat16), w1_ref[...],
                     preferred_element_type=jnp.float32)
        z1_ref[...] = z1
        s1_ref[0:1, :] += jnp.sum(z1, axis=0, keepdims=True)
        s1_ref[1:2, :] += jnp.sum(z1 * z1, axis=0, keepdims=True)

    # TODO(synk): for v7x's two TensorCores, mark the batch axis "parallel" with
    # per-core partial stats and a cross-core combine before pass 2.
    z1, s1 = pl.pallas_call(
        pass1,
        out_shape=(jax.ShapeDtypeStruct((b_pad, h1_p), jnp.float32),
                   jax.ShapeDtypeStruct((2, h1_p), jnp.float32)),
        grid=(n_tiles,),
        in_specs=[pl.BlockSpec((TM, in_dim), lambda i: (i, 0)),
                  pl.BlockSpec((in_dim, h1_p), lambda i: (0, 0))],
        out_specs=(pl.BlockSpec((TM, h1_p), lambda i: (i, 0)),
                   pl.BlockSpec((2, h1_p), lambda i: (0, 0))),
        compiler_params=pltpu.CompilerParams(
            dimension_semantics=("arbitrary",), vmem_limit_bytes=budget),
    )(x, p["w1"])

    # ---- pass 2: h1 = relu(bn1(z1)); z2 = h1 @ w2; accumulate layer-2 stats ----
    def pass2(z1_ref, s1_ref, g1_ref, be1_ref, w2_ref, z2_ref, s2_ref):
        i = pl.program_id(0)

        @pl.when(i == 0)
        def _():
            s2_ref[...] = jnp.zeros_like(s2_ref)

        scale, shift = scale_shift(s1_ref, g1_ref, be1_ref)
        h1 = jnp.maximum(z1_ref[...] * scale + shift, 0.0)
        if need_mask:
            row = i * TM + lax.broadcasted_iota(jnp.int32, (TM, 1), 0)
            h1 = jnp.where(row < B, h1, 0.0)     # padded rows must not pollute stats2
        z2 = jnp.dot(h1.astype(jnp.bfloat16), w2_ref[...],
                     preferred_element_type=jnp.float32)
        z2_ref[...] = z2
        s2_ref[0:1, :] += jnp.sum(z2, axis=0, keepdims=True)
        s2_ref[1:2, :] += jnp.sum(z2 * z2, axis=0, keepdims=True)

    z2, s2 = pl.pallas_call(
        pass2,
        out_shape=(jax.ShapeDtypeStruct((b_pad, h2_p), jnp.float32),
                   jax.ShapeDtypeStruct((2, h2_p), jnp.float32)),
        grid=(n_tiles,),
        in_specs=[pl.BlockSpec((TM, h1_p), lambda i: (i, 0)),
                  pl.BlockSpec((2, h1_p), lambda i: (0, 0)),
                  pl.BlockSpec((1, h1_p), lambda i: (0, 0)),
                  pl.BlockSpec((1, h1_p), lambda i: (0, 0)),
                  pl.BlockSpec((h1_p, h2_p), lambda i: (0, 0))],
        out_specs=(pl.BlockSpec((TM, h2_p), lambda i: (i, 0)),
                   pl.BlockSpec((2, h2_p), lambda i: (0, 0))),
        compiler_params=pltpu.CompilerParams(
            dimension_semantics=("arbitrary",), vmem_limit_bytes=budget),
    )(z1, s1, p["g1"], p["be1"], p["w2"])

    # ---- pass 3: h2 = relu(bn2(z2)); y = h2 @ w3 + b3 ----
    def pass3(z2_ref, s2_ref, g2_ref, be2_ref, w3_ref, b3_ref, y_ref):
        scale, shift = scale_shift(s2_ref, g2_ref, be2_ref)
        h2 = jnp.maximum(z2_ref[...] * scale + shift, 0.0)
        y = jnp.dot(h2.astype(jnp.bfloat16), w3_ref[...],
                    preferred_element_type=jnp.float32) + b3_ref[...]
        y_ref[...] = y.astype(y_ref.dtype)

    y = pl.pallas_call(
        pass3,
        out_shape=jax.ShapeDtypeStruct((b_pad, out_p), jnp.float32),
        grid=(n_tiles,),
        in_specs=[pl.BlockSpec((TM, h2_p), lambda i: (i, 0)),
                  pl.BlockSpec((2, h2_p), lambda i: (0, 0)),
                  pl.BlockSpec((1, h2_p), lambda i: (0, 0)),
                  pl.BlockSpec((1, h2_p), lambda i: (0, 0)),
                  pl.BlockSpec((h2_p, out_p), lambda i: (0, 0)),
                  pl.BlockSpec((1, out_p), lambda i: (0, 0))],
        out_specs=pl.BlockSpec((TM, out_p), lambda i: (i, 0)),
        compiler_params=pltpu.CompilerParams(
            dimension_semantics=("parallel",), vmem_limit_bytes=budget),
    )(z2, s2, p["g2"], p["be2"], p["w3"], p["b3"])

    return y[:B, :p["out_dim"]]


# ---------------------------------------------------------------------------
# Dispatcher.
# ---------------------------------------------------------------------------
def net_forward(x, prepared, *, force_tiled=False):
    """x: [B, in_dim] float32. prepared: output of prepare_params (constants)."""
    budget = _vmem_budget_bytes()
    B = x.shape[0]
    b_pad = _round_up(B, 8)

    param_bytes = sum(int(v.size) * v.dtype.itemsize
                      for v in prepared.values() if hasattr(v, "dtype"))
    act = max(prepared["h1_p"], prepared["h2_p"], prepared["out_p"])
    # No double-buffering on the fused path (memory_space=VMEM, grid=()), so count
    # each operand once plus generous f32 temporary headroom.
    footprint = (b_pad * prepared["in_dim"] * 4     # x
                 + param_bytes                      # weights / BN params
                 + b_pad * prepared["out_p"] * 4    # output
                 + 6 * b_pad * act * 4)             # in-kernel activation temporaries

    if force_tiled or footprint > budget:
        return _tiled_forward(x, prepared, budget)
    return _fused_forward(x, prepared, budget)


# ---------------------------------------------------------------------------
# Init + references (PyTorch semantics).
# ---------------------------------------------------------------------------
def init_params(key, in_dim, n_hidden_1, n_hidden_2, out_dim):
    ks = jax.random.split(key, 6)

    def linear(kw, kb, fan_in, fan_out):
        # PyTorch nn.Linear default init: U(-1/sqrt(fan_in), 1/sqrt(fan_in))
        bound = 1.0 / jnp.sqrt(jnp.float32(fan_in))
        w = jax.random.uniform(kw, (fan_in, fan_out), jnp.float32, -bound, bound)
        b = jax.random.uniform(kb, (1, fan_out), jnp.float32, -bound, bound)
        return w, b

    w1, b1 = linear(ks[0], ks[1], in_dim, n_hidden_1)
    w2, b2 = linear(ks[2], ks[3], n_hidden_1, n_hidden_2)
    w3, b3 = linear(ks[4], ks[5], n_hidden_2, out_dim)

    return {
        "w1": w1, "b1": b1,
        "g1": jnp.ones((1, n_hidden_1), jnp.float32),
        "be1": jnp.zeros((1, n_hidden_1), jnp.float32),
        "w2": w2, "b2": b2,
        "g2": jnp.ones((1, n_hidden_2), jnp.float32),
        "be2": jnp.zeros((1, n_hidden_2), jnp.float32),
        "w3": w3, "b3": b3,
    }


def _bn_relu_ref(h, g, be):
    mu = jnp.mean(h, axis=0, keepdims=True)
    var = jnp.mean((h - mu) ** 2, axis=0, keepdims=True)
    return jnp.maximum((h - mu) / jnp.sqrt(var + EPS) * g + be, 0.0)


def _reference_f32(x, p):
    h = _bn_relu_ref(x @ p["w1"] + p["b1"], p["g1"], p["be1"])
    h = _bn_relu_ref(h @ p["w2"] + p["b2"], p["g2"], p["be2"])
    return h @ p["w3"] + p["b3"]


def _reference_bf16_matmul(x, p):
    def dot(a, w):
        return jnp.dot(a.astype(jnp.bfloat16), w.astype(jnp.bfloat16),
                       preferred_element_type=jnp.float32)
    h = _bn_relu_ref(dot(x, p["w1"]) + p["b1"], p["g1"], p["be1"])
    h = _bn_relu_ref(dot(h, p["w2"]) + p["b2"], p["g2"], p["be2"])
    return dot(h, p["w3"]) + p["b3"]


if __name__ == "__main__":
    key = jax.random.PRNGKey(0)
    k_x, k_p, k_x2 = jax.random.split(key, 3)

    B, in_dim, n_h1, n_h2, out_dim = 8, 32, 64, 32, 16
    x = jax.random.normal(k_x, (B, in_dim), jnp.float32)
    params = init_params(k_p, in_dim, n_h1, n_h2, out_dim)
    prepared = prepare_params(params)          # constant prep hoisted: done once

    # Small batch: fused single-block path.
    y = net_forward(x, prepared)
    y = jax.block_until_ready(y)
    assert y.shape == (B, out_dim)
    y_ref_bf16 = _reference_bf16_matmul(x, params)
    assert jnp.allclose(y, y_ref_bf16, atol=1e-2, rtol=1e-2), "fused: mismatch vs bf16 reference"
    y_ref_f32 = _reference_f32(x, params)
    assert jnp.allclose(y, y_ref_f32, atol=2.5e-1, rtol=2.5e-1), "fused: mismatch vs f32 reference"

    # Larger batch (not a tile multiple): exercise the batch-tiled two-phase BN path.
    B2 = 1000
    x2 = jax.random.normal(k_x2, (B2, in_dim), jnp.float32)
    y2 = net_forward(x2, prepared, force_tiled=True)
    y2 = jax.block_until_ready(y2)
    assert y2.shape == (B2, out_dim)
    y2_ref = _reference_bf16_matmul(x2, params)
    assert jnp.allclose(y2, y2_ref, atol=2e-2, rtol=2e-2), "tiled: mismatch vs bf16 reference"

    print("KERNEL_OK")
</pallas_src>

<mosaic_0001>
module attributes {stable_mosaic.version = 11 : i64} {
  func.func @kernel(%arg0: memref<8x32xf32, #tpu.memory_space<vmem>>, %arg1: memref<32x128xbf16, #tpu.memory_space<vmem>>, %arg2: memref<1x128xf32, #tpu.memory_space<vmem>>, %arg3: memref<1x128xf32, #tpu.memory_space<vmem>>, %arg4: memref<128x128xbf16, #tpu.memory_space<vmem>>, %arg5: memref<1x128xf32, #tpu.memory_space<vmem>>, %arg6: memref<1x128xf32, #tpu.memory_space<vmem>>, %arg7: memref<128x128xbf16, #tpu.memory_space<vmem>>, %arg8: memref<1x128xf32, #tpu.memory_space<vmem>>, %arg9: memref<8x128xf32, #tpu.memory_space<vmem>>) attributes {dimension_semantics = [], scalar_prefetch = 0 : i64, scratch_operands = 0 : i64, tpu.core_type = #tpu.core_type<tc>} {
    %c0 = arith.constant 0 : index
    %c0_0 = arith.constant 0 : index
    %0 = vector.load %arg0[%c0, %c0_0] : memref<8x32xf32, #tpu.memory_space<vmem>>, vector<8x32xf32>
    %1 = arith.truncf %0 : vector<8x32xf32> to vector<8x32xbf16>
    %c0_1 = arith.constant 0 : index
    %c0_2 = arith.constant 0 : index
    %2 = vector.load %arg1[%c0_1, %c0_2] : memref<32x128xbf16, #tpu.memory_space<vmem>>, vector<32x128xbf16>
    %cst = arith.constant dense<0.000000e+00> : vector<8x128xf32>
    %3 = tpu.matmul %1, %2, %cst {dimension_numbers = #tpu.dot_dimension_numbers<[1], [0], [0], [1], [0, 0, 1, 1], [], []>} : vector<8x32xbf16>, vector<32x128xbf16>, vector<8x128xf32> -> vector<8x128xf32>
    %cst_3 = arith.constant dense<0.000000e+00> : vector<128xf32>
    %4 = vector.multi_reduction <add>, %3, %cst_3 [0] : vector<8x128xf32> to vector<128xf32>
    %5 = vector.shape_cast %4 : vector<128xf32> to vector<1x128xf32>
    %cst_4 = arith.constant 1.250000e-01 : f32
    %6 = vector.broadcast %cst_4 : f32 to vector<1x128xf32>
    %7 = arith.mulf %5, %6 : vector<1x128xf32>
    %8 = arith.mulf %3, %3 : vector<8x128xf32>
    %cst_5 = arith.constant dense<0.000000e+00> : vector<128xf32>
    %9 = vector.multi_reduction <add>, %8, %cst_5 [0] : vector<8x128xf32> to vector<128xf32>
    %10 = vector.shape_cast %9 : vector<128xf32> to vector<1x128xf32>
    %cst_6 = arith.constant 1.250000e-01 : f32
    %11 = vector.broadcast %cst_6 : f32 to vector<1x128xf32>
    %12 = arith.mulf %10, %11 : vector<1x128xf32>
    %13 = arith.mulf %7, %7 : vector<1x128xf32>
    %14 = arith.subf %12, %13 : vector<1x128xf32>
    %cst_7 = arith.constant 0.000000e+00 : f32
    %15 = vector.broadcast %cst_7 : f32 to vector<1x128xf32>
    %16 = arith.maximumf %14, %15 : vector<1x128xf32>
    %c0_8 = arith.constant 0 : index
    %c0_9 = arith.constant 0 : index
    %17 = vector.load %arg2[%c0_8, %c0_9] : memref<1x128xf32, #tpu.memory_space<vmem>>, vector<1x128xf32>
    %cst_10 = arith.constant 9.99999974E-6 : f32
    %18 = vector.broadcast %cst_10 : f32 to vector<1x128xf32>
    %19 = arith.addf %16, %18 : vector<1x128xf32>
    %20 = math.rsqrt %19 : vector<1x128xf32>
    %21 = arith.mulf %17, %20 : vector<1x128xf32>
    %c0_11 = arith.constant 0 : index
    %c0_12 = arith.constant 0 : index
    %22 = vector.load %arg3[%c0_11, %c0_12] : memref<1x128xf32, #tpu.memory_space<vmem>>, vector<1x128xf32>
    %23 = arith.mulf %7, %21 : vector<1x128xf32>
    %24 = arith.subf %22, %23 : vector<1x128xf32>
    %25 = vector.broadcast %21 : vector<1x128xf32> to vector<8x128xf32>
    %26 = arith.mulf %3, %25 : vector<8x128xf32>
    %27 = vector.broadcast %24 : vector<1x128xf32> to vector<8x128xf32>
    %28 = arith.addf %26, %27 : vector<8x128xf32>
    %cst_13 = arith.constant 0.000000e+00 : f32
    %29 = vector.broadcast %cst_13 : f32 to vector<8x128xf32>
    %30 = arith.maximumf %28, %29 : vector<8x128xf32>
    %31 = arith.truncf %30 : vector<8x128xf32> to vector<8x128xbf16>
    %c0_14 = arith.constant 0 : index
    %c0_15 = arith.constant 0 : index
    %32 = vector.load %arg4[%c0_14, %c0_15] : memref<128x128xbf16, #tpu.memory_space<vmem>>, vector<128x128xbf16>
    %cst_16 = arith.constant dense<0.000000e+00> : vector<8x128xf32>
    %33 = tpu.matmul %31, %32, %cst_16 {dimension_numbers = #tpu.dot_dimension_numbers<[1], [0], [0], [1], [0, 0, 1, 1], [], []>} : vector<8x128xbf16>, vector<128x128xbf16>, vector<8x128xf32> -> vector<8x128xf32>
    %cst_17 = arith.constant dense<0.000000e+00> : vector<128xf32>
    %34 = vector.multi_reduction <add>, %33, %cst_17 [0] : vector<8x128xf32> to vector<128xf32>
    %35 = vector.shape_cast %34 : vector<128xf32> to vector<1x128xf32>
    %cst_18 = arith.constant 1.250000e-01 : f32
    %36 = vector.broadcast %cst_18 : f32 to vector<1x128xf32>
    %37 = arith.mulf %35, %36 : vector<1x128xf32>
    %38 = arith.mulf %33, %33 : vector<8x128xf32>
    %cst_19 = arith.constant dense<0.000000e+00> : vector<128xf32>
    %39 = vector.multi_reduction <add>, %38, %cst_19 [0] : vector<8x128xf32> to vector<128xf32>
    %40 = vector.shape_cast %39 : vector<128xf32> to vector<1x128xf32>
    %cst_20 = arith.constant 1.250000e-01 : f32
    %41 = vector.broadcast %cst_20 : f32 to vector<1x128xf32>
    %42 = arith.mulf %40, %41 : vector<1x128xf32>
    %43 = arith.mulf %37, %37 : vector<1x128xf32>
    %44 = arith.subf %42, %43 : vector<1x128xf32>
    %cst_21 = arith.constant 0.000000e+00 : f32
    %45 = vector.broadcast %cst_21 : f32 to vector<1x128xf32>
    %46 = arith.maximumf %44, %45 : vector<1x128xf32>
    %c0_22 = arith.constant 0 : index
    %c0_23 = arith.constant 0 : index
    %47 = vector.load %arg5[%c0_22, %c0_23] : memref<1x128xf32, #tpu.memory_space<vmem>>, vector<1x128xf32>
    %cst_24 = arith.constant 9.99999974E-6 : f32
    %48 = vector.broadcast %cst_24 : f32 to vector<1x128xf32>
    %49 = arith.addf %46, %48 : vector<1x128xf32>
    %50 = math.rsqrt %49 : vector<1x128xf32>
    %51 = arith.mulf %47, %50 : vector<1x128xf32>
    %c0_25 = arith.constant 0 : index
    %c0_26 = arith.constant 0 : index
    %52 = vector.load %arg6[%c0_25, %c0_26] : memref<1x128xf32, #tpu.memory_space<vmem>>, vector<1x128xf32>
    %53 = arith.mulf %37, %51 : vector<1x128xf32>
    %54 = arith.subf %52, %53 : vector<1x128xf32>
    %55 = vector.broadcast %51 : vector<1x128xf32> to vector<8x128xf32>
    %56 = arith.mulf %33, %55 : vector<8x128xf32>
    %57 = vector.broadcast %54 : vector<1x128xf32> to vector<8x128xf32>
    %58 = arith.addf %56, %57 : vector<8x128xf32>
    %cst_27 = arith.constant 0.000000e+00 : f32
    %59 = vector.broadcast %cst_27 : f32 to vector<8x128xf32>
    %60 = arith.maximumf %58, %59 : vector<8x128xf32>
    %61 = arith.truncf %60 : vector<8x128xf32> to vector<8x128xbf16>
    %c0_28 = arith.constant 0 : index
    %c0_29 = arith.constant 0 : index
    %62 = vector.load %arg7[%c0_28, %c0_29] : memref<128x128xbf16, #tpu.memory_space<vmem>>, vector<128x128xbf16>
    %cst_30 = arith.constant dense<0.000000e+00> : vector<8x128xf32>
    %63 = tpu.matmul %61, %62, %cst_30 {dimension_numbers = #tpu.dot_dimension_numbers<[1], [0], [0], [1], [0, 0, 1, 1], [], []>} : vector<8x128xbf16>, vector<128x128xbf16>, vector<8x128xf32> -> vector<8x128xf32>
    %c0_31 = arith.constant 0 : index
    %c0_32 = arith.constant 0 : index
    %64 = vector.load %arg8[%c0_31, %c0_32] : memref<1x128xf32, #tpu.memory_space<vmem>>, vector<1x128xf32>
    %65 = vector.broadcast %64 : vector<1x128xf32> to vector<8x128xf32>
    %66 = arith.addf %63, %65 : vector<8x128xf32>
    %c0_33 = arith.constant 0 : index
    %c0_34 = arith.constant 0 : index
    %67 = vector.load %arg9[%c0_33, %c0_34] : memref<8x128xf32, #tpu.memory_space<vmem>>, vector<8x128xf32>
    tpu.vector_store %arg9[%c0_33, %c0_34], %66 {strides = array<i32>} : memref<8x128xf32, #tpu.memory_space<vmem>>, vector<8x128xf32>,
    return
  }
}

</mosaic_0001>

<llo_original>
// kernel: tpu_custom_call.1
$region0: #{tpu_custom_call.1}
  #allocation0 [shape = 'u32[]', space=smem, size = 0x4, offset = 0x4, fixed_abs, tag = 'smem constant byte address 0x4 - core index']
  #allocation1 [shape = 'u32[144,128]{1,0:T(1,128)}', space=vmem, size = 0x12000, scoped, tag = 'internal scratch']
  %s0 = inlined_call_operand.hbm [shape: f32[8,32], index: 0, kind: input, shape index: {}]
  %s1 = inlined_call_operand.hbm [shape: bf16[32,128], index: 1, kind: input, shape index: {}]
  %s2 = inlined_call_operand.vmem [shape: f32[1,128], index: 2, kind: input, shape index: {}]
  %s3 = inlined_call_operand.vmem [shape: f32[1,128], index: 3, kind: input, shape index: {}]
  %s4 = inlined_call_operand.hbm [shape: bf16[128,128], index: 4, kind: input, shape index: {}]
  %s5 = inlined_call_operand.vmem [shape: f32[1,128], index: 5, kind: input, shape index: {}]
  %s6 = inlined_call_operand.vmem [shape: f32[1,128], index: 6, kind: input, shape index: {}]
  %s7 = inlined_call_operand.hbm [shape: bf16[128,128], index: 7, kind: input, shape index: {}]
  %s8 = inlined_call_operand.vmem [shape: f32[1,128], index: 8, kind: input, shape index: {}]
  %s9 = inlined_call_operand.hbm [shape: f32[8,128], index: 9, kind: output, shape index: {}]
  %s10 = sld [smem:[#allocation0]]
  $region62: #{tpu_custom_call.1} parent=0
    _
  %s12 = ssub.s32 1, %s10
  %s13 = scalar_select 0, %s12, %s10
  $region1: #{tpu_custom_call.1} parent=0
    #allocation2 [shape = 'u8[4096]{0}', space=vmem, size = 0x1000, scoped, tag = 'input window, operand 0, single buffered']
    #allocation3 [shape = 's32[1]{0}', space=sflag, size = 0x4, scoped, tag = 'scoped memory for tpu_custom_call.1']
    #allocation4 [shape = 's32[1]{0}', space=sflag, size = 0x4, scoped, tag = 'scoped memory for tpu_custom_call.1']
    #allocation5 [shape = 'u8[8192]{0}', space=vmem, size = 0x2000, scoped, tag = 'input window, operand 1, single buffered']
    #allocation6 [shape = 's32[1]{0}', space=sflag, size = 0x4, scoped, tag = 'scoped memory for tpu_custom_call.1']
    #allocation7 [shape = 'u8[32768]{0}', space=vmem, size = 0x8000, scoped, tag = 'input window, operand 4, single buffered']
    #allocation8 [shape = 'u8[32768]{0}', space=vmem, size = 0x8000, scoped, tag = 'input window, operand 7, single buffered']
    #allocation9 [shape = 's32[1]{0}', space=sflag, size = 0x4, scoped, tag = 'scoped memory for tpu_custom_call.1']
    #allocation10 [shape = 'u8[4096]{0}', space=vmem, size = 0x1000, scoped, tag = 'output window, operand 0, single buffered']
    %14 = vsyncpa [#allocation3], 0
    %15 = vsyncpa [#allocation6], 0
    %16 = vsyncpa [#allocation9], 0
    %17 = vsyncpa [#allocation4], 0
    // Predicated region
    $region2: #{tpu_custom_call.1} parent=1 // pred_check
      _
    $region3: #{tpu_custom_call.1} parent=1 // pred_check_branch
      %19 = sbr.rel (0) target = $region5
    $region4: #{tpu_custom_call.1} parent=1 // pred_region
      %s21 = ssub.s32 128, 128
      %22 = vsyncadd [#allocation3], %s21
      %s24 = sshll.u32 [#allocation2], 4
      %s25 = int_to_ptr.vmem [resolvable:$true] %s24
      %27 = dma.hbm_to_vmem [thread:$0]  %s0, 128, %s25, [#allocation3]
    $region5: #{tpu_custom_call.1} parent=1 // pred_fallthru
      _
    // Predicated region
    $region6: #{tpu_custom_call.1} parent=1 // pred_check
      _
    $region7: #{tpu_custom_call.1} parent=1 // pred_check_branch
      %29 = sbr.rel (0) target = $region9
    $region8: #{tpu_custom_call.1} parent=1 // pred_region
      %s31 = ssub.s32 256, 256
      %32 = vsyncadd [#allocation6], %s31
      %s33 = sshll.u32 [#allocation5], 4
      %s34 = int_to_ptr.vmem [resolvable:$true] %s33
      %39 = dma.hbm_to_vmem [thread:$0]  %s1, 256, %s34, [#allocation6], 64, 64, 4
    $region9: #{tpu_custom_call.1} parent=1 // pred_fallthru
      _
    // Predicated region
    $region10: #{tpu_custom_call.1} parent=1 // pred_check
      _
    $region11: #{tpu_custom_call.1} parent=1 // pred_check_branch
      %41 = sbr.rel (0) target = $region13
    $region12: #{tpu_custom_call.1} parent=1 // pred_region
      _
    $region13: #{tpu_custom_call.1} parent=1 // pred_fallthru
      _
    // Predicated region
    $region14: #{tpu_custom_call.1} parent=1 // pred_check
      _
    $region15: #{tpu_custom_call.1} parent=1 // pred_check_branch
      %43 = sbr.rel (0) target = $region17
    $region16: #{tpu_custom_call.1} parent=1 // pred_region
      _
    $region17: #{tpu_custom_call.1} parent=1 // pred_fallthru
      _
    // Predicated region
    $region18: #{tpu_custom_call.1} parent=1 // pred_check
      _
    $region19: #{tpu_custom_call.1} parent=1 // pred_check_branch
      %45 = sbr.rel (0) target = $region21
    $region20: #{tpu_custom_call.1} parent=1 // pred_region
      %s47 = ssub.s32 1024, 1024
      %48 = vsyncadd [#allocation6], %s47
      %s49 = sshll.u32 [#allocation7], 4
      %s50 = int_to_ptr.vmem [resolvable:$true] %s49
      %55 = dma.hbm_to_vmem [thread:$0]  %s4, 1024, %s50, [#allocation6], 64, 64, 4
    $region21: #{tpu_custom_call.1} parent=1 // pred_fallthru
      _
    // Predicated region
    $region22: #{tpu_custom_call.1} parent=1 // pred_check
      _
    $region23: #{tpu_custom_call.1} parent=1 // pred_check_branch
      %57 = sbr.rel (0) target = $region25
    $region24: #{tpu_custom_call.1} parent=1 // pred_region
      _
    $region25: #{tpu_custom_call.1} parent=1 // pred_fallthru
      _
    // Predicated region
    $region26: #{tpu_custom_call.1} parent=1 // pred_check
      _
    $region27: #{tpu_custom_call.1} parent=1 // pred_check_branch
      %59 = sbr.rel (0) target = $region29
    $region28: #{tpu_custom_call.1} parent=1 // pred_region
      _
    $region29: #{tpu_custom_call.1} parent=1 // pred_fallthru
      _
    // Predicated region
    $region30: #{tpu_custom_call.1} parent=1 // pred_check
      _
    $region31: #{tpu_custom_call.1} parent=1 // pred_check_branch
      %61 = sbr.rel (0) target = $region33
    $region32: #{tpu_custom_call.1} parent=1 // pred_region
      %s63 = ssub.s32 1024, 1024
      %64 = vsyncadd [#allocation9], %s63
      %s65 = sshll.u32 [#allocation8], 4
      %s66 = int_to_ptr.vmem [resolvable:$true] %s65
      %71 = dma.hbm_to_vmem [thread:$0]  %s7, 1024, %s66, [#allocation9], 64, 64, 4
    $region33: #{tpu_custom_call.1} parent=1 // pred_fallthru
      _
    // Predicated region
    $region34: #{tpu_custom_call.1} parent=1 // pred_check
      _
    $region35: #{tpu_custom_call.1} parent=1 // pred_check_branch
      %73 = sbr.rel (0) target = $region37
    $region36: #{tpu_custom_call.1} parent=1 // pred_region
      _
    $region37: #{tpu_custom_call.1} parent=1 // pred_fallthru
      _
    // Predicated region
    $region38: #{tpu_custom_call.1} parent=1 // pred_check
      _
    $region39: #{tpu_custom_call.1} parent=1 // pred_check_branch
      %75 = sbr.rel (0) target = $region41
    $region40: #{tpu_custom_call.1} parent=1 // pred_region
      %76 = dma.done [#allocation3], 128
    $region41: #{tpu_custom_call.1} parent=1 // pred_fallthru
      _
    // Predicated region
    $region42: #{tpu_custom_call.1} parent=1 // pred_check
      _
    $region43: #{tpu_custom_call.1} parent=1 // pred_check_branch
      %78 = sbr.rel (0) target = $region45
    $region44: #{tpu_custom_call.1} parent=1 // pred_region
      %79 = dma.done [#allocation6], 256
    $region45: #{tpu_custom_call.1} parent=1 // pred_fallthru
      _
    // Predicated region
    $region46: #{tpu_custom_call.1} parent=1 // pred_check
      _
    $region47: #{tpu_custom_call.1} parent=1 // pred_check_branch
      %81 = sbr.rel (0) target = $region49
    $region48: #{tpu_custom_call.1} parent=1 // pred_region
      %82 = dma.done [#allocation6], 1024
    $region49: #{tpu_custom_call.1} parent=1 // pred_fallthru
      _
    // Predicated region
    $region50: #{tpu_custom_call.1} parent=1 // pred_check
      _
    $region51: #{tpu_custom_call.1} parent=1 // pred_check_branch
      %84 = sbr.rel (0) target = $region53
    $region52: #{tpu_custom_call.1} parent=1 // pred_region
      %85 = dma.done [#allocation9], 1024
    $region53: #{tpu_custom_call.1} parent=1 // pred_fallthru
      _
    %v87 = vld [vmem:[#allocation2] sm:$0xff]
    %v88 = vpack.c.bf16 %v87, %v87
    %v89 = vld [vmem:[#allocation5] sm:$0xf]
    %v90 = vld [vmem:[#allocation5 + $0x4] sm:$0xf]
    %v91 = vld [vmem:[#allocation5 + $0x8] sm:$0xf]
    %v92 = vld [vmem:[#allocation5 + $0xc] sm:$0xf]
    %v97 = vunpack.c.l.b16 %v89
    %v98 = vunpack.c.l.b16 %v90
    %v99 = vunpack.c.l.b16 %v91
    %v100 = vunpack.c.l.b16 %v92
    %v101 = vpack.c.b16 %v98, %v97
    %v102 = vpack.c.b16 %v100, %v99
    %vm105 = vcmask 261120
    %v107 = vsel %vm105, %v88, 0
    %109 = vmatprep.subr.bf16.mxu0 0
    %110 = vmatpush1.bf16.msra.mxu0 0
    %111 = vmatprep.subr.bf16.mxu0 0
    %112 = vmatpush1.bf16.msra.mxu0 0
    %113 = vmatprep.subr.bf16.mxu0 0
    %114 = vmatpush1.bf16.msra.mxu0 0
    %115 = vmatprep.subr.bf16.mxu0 0
    %116 = vmatpush1.bf16.msra.mxu0 0
    %117 = vmatprep.subr.bf16.mxu0 0
    %118 = vmatpush1.bf16.msra.mxu0 0
    %119 = vmatprep.subr.bf16.mxu0 0
    %120 = vmatpush1.bf16.msra.mxu0 0
    %121 = vmatprep.subr.bf16.mxu0 0
    %122 = vmatpush1.bf16.msra.mxu0 %v102
    %123 = vmatprep.subr.bf16.mxu0 0
    %124 = vmatpush1.bf16.msra.mxu0 %v101
    %125 = vmatprep.subr.bf16.mxu0 0
    %126 = vmatpush2.bf16.msra.mxu0 0
    %127 = vmatprep.subr.bf16.mxu0 0
    %128 = vmatpush2.bf16.msra.mxu0 0
    %129 = vmatprep.subr.bf16.mxu0 0
    %130 = vmatpush2.bf16.msra.mxu0 0
    %131 = vmatprep.subr.bf16.mxu0 0
    %132 = vmatpush2.bf16.msra.mxu0 0
    %133 = vmatprep.subr.bf16.mxu0 0
    %134 = vmatpush2.bf16.msra.mxu0 0
    %135 = vmatprep.subr.bf16.mxu0 0
    %136 = vmatpush2.bf16.msra.mxu0 0
    %137 = vmatprep.subr.bf16.mxu0 0
    %138 = vmatpush2.bf16.msra.mxu0 0
    %139 = vmatprep.subr.bf16.mxu0 0
    %140 = vmatpush2.bf16.msra.mxu0 0
    %141 = vmatprep.mubr.bf16.mxu0 0
    %142 = vmatmul.mubr.bf16.gmra.mxu0 %v107
    %v143 = vpop.f32.mrf.mxu0
    %v144 = vadd.f32 0.0, %v143
    %v145 = vpop.f32.mrf.mxu0
    %v146 = vpop.f32.mrf.mxu0
    %v147 = vpop.f32.mrf.mxu0
    %148 = vdwg.mxu0
    %v149 = vrot.slane %v144, 4
    %v150 = vadd.f32 %v144, %v149
    %v151 = vrot.slane %v150, 2
    %v152 = vadd.f32 %v150, %v151
    %v153 = vrot.slane %v152, 1
    %v154 = vadd.f32 %v152, %v153
    %v155 = vmul.f32 %v154, 0.125
    %v156 = vmul.f32 %v144, %v144
    %v157 = vrot.slane %v156, 4
    %v158 = vadd.f32 %v156, %v157
    %v159 = vrot.slane %v158, 2
    %v160 = vadd.f32 %v158, %v159
    %v161 = vrot.slane %v160, 1
    %v162 = vadd.f32 %v160, %v161
    %v163 = vmul.f32 %v162, 0.125
    %v164 = vmul.f32 %v155, %v155
    %v165 = vsub.f32 %v163, %v164
    %v166 = vmax.f32 %v165, 0.0
    %v167 = vld [vmem:[%s2] sm:$0x1]
    %v168 = vadd.f32 %v166, 1e-05
    %v169 = vrsqrt.pop %v168
    %v170 = vmul.f32 %v167, %v169
    %v171 = vld [vmem:[%s3] sm:$0x1]
    %v172 = vmul.f32 %v155, %v170
    %v173 = vsub.f32 %v171, %v172
    %v175 = vlaneseq
    %v176 = vshrl.u32 %v175, 7
    %v177 = vsub.s32 0, %v176
    %v178 = vrot.slane %v170, %v177
    %v180 = vmul.f32 %v144, %v178
    %v182 = vlaneseq
    %v183 = vshrl.u32 %v182, 7
    %v184 = vsub.s32 0, %v183
    %v185 = vrot.slane %v173, %v184
    %v187 = vadd.f32 %v180, %v185
    %v188 = vmax.f32 %v187, 0.0
    %v189 = vpack.c.bf16 %v188, %v188
    %v190 = vld [vmem:[#allocation7] sm:$0xf]
    %v191 = vld [vmem:[#allocation7 + $0x4] sm:$0xf]
    %v192 = vld [vmem:[#allocation7 + $0x8] sm:$0xf]
    %v193 = vld [vmem:[#allocation7 + $0xc] sm:$0xf]
    %v194 = vld [vmem:[#allocation7 + $0x10] sm:$0xf]
    %v195 = vld [vmem:[#allocation7 + $0x14] sm:$0xf]
    %v196 = vld [vmem:[#allocation7 + $0x18] sm:$0xf]
    %v197 = vld [vmem:[#allocation7 + $0x1c] sm:$0xf]
    %v198 = vld [vmem:[#allocation7 + $0x20] sm:$0xf]
    %v199 = vld [vmem:[#allocation7 + $0x24] sm:$0xf]
    %v200 = vld [vmem:[#allocation7 + $0x28] sm:$0xf]
    %v201 = vld [vmem:[#allocation7 + $0x2c] sm:$0xf]
    %v202 = vld [vmem:[#allocation7 + $0x30] sm:$0xf]
    %v203 = vld [vmem:[#allocation7 + $0x34] sm:$0xf]
    %v204 = vld [vmem:[#allocation7 + $0x38] sm:$0xf]
    %v205 = vld [vmem:[#allocation7 + $0x3c] sm:$0xf]
    %v222 = vunpack.c.l.b16 %v190
    %v223 = vunpack.c.l.b16 %v191
    %v224 = vunpack.c.l.b16 %v192
    %v225 = vunpack.c.l.b16 %v193
    %v226 = vunpack.c.l.b16 %v194
    %v227 = vunpack.c.l.b16 %v195
    %v228 = vunpack.c.l.b16 %v196
    %v229 = vunpack.c.l.b16 %v197
    %v230 = vunpack.c.l.b16 %v198
    %v231 = vunpack.c.l.b16 %v199
    %v232 = vunpack.c.l.b16 %v200
    %v233 = vunpack.c.l.b16 %v201
    %v234 = vunpack.c.l.b16 %v202
    %v235 = vunpack.c.l.b16 %v203
    %v236 = vunpack.c.l.b16 %v204
    %v237 = vunpack.c.l.b16 %v205
    %v238 = vpack.c.b16 %v223, %v222
    %v239 = vpack.c.b16 %v225, %v224
    %v240 = vpack.c.b16 %v227, %v226
    %v241 = vpack.c.b16 %v229, %v228
    %v242 = vpack.c.b16 %v231, %v230
    %v243 = vpack.c.b16 %v233, %v232
    %v244 = vpack.c.b16 %v235, %v234
    %v245 = vpack.c.b16 %v237, %v236
    %254 = vmatprep.subr.bf16.mxu0 0
    %255 = vmatpush1.bf16.msra.mxu0 %v245
    %256 = vmatprep.subr.bf16.mxu0 0
    %257 = vmatpush1.bf16.msra.mxu0 %v244
    %258 = vmatprep.subr.bf16.mxu0 0
    %259 = vmatpush1.bf16.msra.mxu0 %v243
    %260 = vmatprep.subr.bf16.mxu0 0
    %261 = vmatpush1.bf16.msra.mxu0 %v242
    %262 = vmatprep.subr.bf16.mxu0 0
    %263 = vmatpush1.bf16.msra.mxu0 %v241
    %264 = vmatprep.subr.bf16.mxu0 0
    %265 = vmatpush1.bf16.msra.mxu0 %v240
    %266 = vmatprep.subr.bf16.mxu0 0
    %267 = vmatpush1.bf16.msra.mxu0 %v239
    %268 = vmatprep.subr.bf16.mxu0 0
    %269 = vmatpush1.bf16.msra.mxu0 %v238
    %270 = vmatprep.subr.bf16.mxu0 0
    %271 = vmatpush2.bf16.msra.mxu0 0
    %272 = vmatprep.subr.bf16.mxu0 0
    %273 = vmatpush2.bf16.msra.mxu0 0
    %274 = vmatprep.subr.bf16.mxu0 0
    %275 = vmatpush2.bf16.msra.mxu0 0
    %276 = vmatprep.subr.bf16.mxu0 0
    %277 = vmatpush2.bf16.msra.mxu0 0
    %278 = vmatprep.subr.bf16.mxu0 0
    %279 = vmatpush2.bf16.msra.mxu0 0
    %280 = vmatprep.subr.bf16.mxu0 0
    %281 = vmatpush2.bf16.msra.mxu0 0
    %282 = vmatprep.subr.bf16.mxu0 0
    %283 = vmatpush2.bf16.msra.mxu0 0
    %284 = vmatprep.subr.bf16.mxu0 0
    %285 = vmatpush2.bf16.msra.mxu0 0
    %286 = vmatprep.mubr.bf16.mxu0 0
    %287 = vmatmul.mubr.bf16.gmra.mxu0 %v189
    %v288 = vpop.f32.mrf.mxu0
    %v289 = vadd.f32 0.0, %v288
    %v290 = vpop.f32.mrf.mxu0
    %v291 = vpop.f32.mrf.mxu0
    %v292 = vpop.f32.mrf.mxu0
    %293 = vdwg.mxu0
    %v294 = vrot.slane %v289, 4
    %v295 = vadd.f32 %v289, %v294
    %v296 = vrot.slane %v295, 2
    %v297 = vadd.f32 %v295, %v296
    %v298 = vrot.slane %v297, 1
    %v299 = vadd.f32 %v297, %v298
    %v300 = vmul.f32 %v299, 0.125
    %v301 = vmul.f32 %v289, %v289
    %v302 = vrot.slane %v301, 4
    %v303 = vadd.f32 %v301, %v302
    %v304 = vrot.slane %v303, 2
    %v305 = vadd.f32 %v303, %v304
    %v306 = vrot.slane %v305, 1
    %v307 = vadd.f32 %v305, %v306
    %v308 = vmul.f32 %v307, 0.125
    %v309 = vmul.f32 %v300, %v300
    %v310 = vsub.f32 %v308, %v309
    %v311 = vmax.f32 %v310, 0.0
    %v312 = vld [vmem:[%s5] sm:$0x1]
    %v313 = vadd.f32 %v311, 1e-05
    %v314 = vrsqrt.pop %v313
    %v315 = vmul.f32 %v312, %v314
    %v316 = vld [vmem:[%s6] sm:$0x1]
    %v317 = vmul.f32 %v300, %v315
    %v318 = vsub.f32 %v316, %v317
    %v320 = vlaneseq
    %v321 = vshrl.u32 %v320, 7
    %v322 = vsub.s32 0, %v321
    %v323 = vrot.slane %v315, %v322
    %v325 = vmul.f32 %v289, %v323
    %v327 = vlaneseq
    %v328 = vshrl.u32 %v327, 7
    %v329 = vsub.s32 0, %v328
    %v330 = vrot.slane %v318, %v329
    %v332 = vadd.f32 %v325, %v330
    %v333 = vmax.f32 %v332, 0.0
    %v334 = vpack.c.bf16 %v333, %v333
    %v335 = vld [vmem:[#allocation8] sm:$0xf]
    %v336 = vld [vmem:[#allocation8 + $0x4] sm:$0xf]
    %v337 = vld [vmem:[#allocation8 + $0x8] sm:$0xf]
    %v338 = vld [vmem:[#allocation8 + $0xc] sm:$0xf]
    %v339 = vld [vmem:[#allocation8 + $0x10] sm:$0xf]
    %v340 = vld [vmem:[#allocation8 + $0x14] sm:$0xf]
    %v341 = vld [vmem:[#allocation8 + $0x18] sm:$0xf]
    %v342 = vld [vmem:[#allocation8 + $0x1c] sm:$0xf]
    %v343 = vld [vmem:[#allocation8 + $0x20] sm:$0xf]
    %v344 = vld [vmem:[#allocation8 + $0x24] sm:$0xf]
    %v345 = vld [vmem:[#allocation8 + $0x28] sm:$0xf]
    %v346 = vld [vmem:[#allocation8 + $0x2c] sm:$0xf]
    %v347 = vld [vmem:[#allocation8 + $0x30] sm:$0xf]
    %v348 = vld [vmem:[#allocation8 + $0x34] sm:$0xf]
    %v349 = vld [vmem:[#allocation8 + $0x38] sm:$0xf]
    %v350 = vld [vmem:[#allocation8 + $0x3c] sm:$0xf]
    %v351 = vld [vmem:[%s8] sm:$0x1]
    %v353 = vlaneseq
    %v354 = vshrl.u32 %v353, 7
    %v355 = vsub.s32 0, %v354
    %v356 = vrot.slane %v351, %v355
    %v374 = vunpack.c.l.b16 %v335
    %v375 = vunpack.c.l.b16 %v336
    %v376 = vunpack.c.l.b16 %v337
    %v377 = vunpack.c.l.b16 %v338
    %v378 = vunpack.c.l.b16 %v339
    %v379 = vunpack.c.l.b16 %v340
    %v380 = vunpack.c.l.b16 %v341
    %v381 = vunpack.c.l.b16 %v342
    %v382 = vunpack.c.l.b16 %v343
    %v383 = vunpack.c.l.b16 %v344
    %v384 = vunpack.c.l.b16 %v345
    %v385 = vunpack.c.l.b16 %v346
    %v386 = vunpack.c.l.b16 %v347
    %v387 = vunpack.c.l.b16 %v348
    %v388 = vunpack.c.l.b16 %v349
    %v389 = vunpack.c.l.b16 %v350
    %v390 = vpack.c.b16 %v375, %v374
    %v391 = vpack.c.b16 %v377, %v376
    %v392 = vpack.c.b16 %v379, %v378
    %v393 = vpack.c.b16 %v381, %v380
    %v394 = vpack.c.b16 %v383, %v382
    %v395 = vpack.c.b16 %v385, %v384
    %v396 = vpack.c.b16 %v387, %v386
    %v397 = vpack.c.b16 %v389, %v388
    %406 = vmatprep.subr.bf16.mxu0 0
    %407 = vmatpush1.bf16.msra.mxu0 %v397
    %408 = vmatprep.subr.bf16.mxu0 0
    %409 = vmatpush1.bf16.msra.mxu0 %v396
    %410 = vmatprep.subr.bf16.mxu0 0
    %411 = vmatpush1.bf16.msra.mxu0 %v395
    %412 = vmatprep.subr.bf16.mxu0 0
    %413 = vmatpush1.bf16.msra.mxu0 %v394
    %414 = vmatprep.subr.bf16.mxu0 0
    %415 = vmatpush1.bf16.msra.mxu0 %v393
    %416 = vmatprep.subr.bf16.mxu0 0
    %417 = vmatpush1.bf16.msra.mxu0 %v392
    %418 = vmatprep.subr.bf16.mxu0 0
    %419 = vmatpush1.bf16.msra.mxu0 %v391
    %420 = vmatprep.subr.bf16.mxu0 0
    %421 = vmatpush1.bf16.msra.mxu0 %v390
    %422 = vmatprep.subr.bf16.mxu0 0
    %423 = vmatpush2.bf16.msra.mxu0 0
    %424 = vmatprep.subr.bf16.mxu0 0
    %425 = vmatpush2.bf16.msra.mxu0 0
    %426 = vmatprep.subr.bf16.mxu0 0
    %427 = vmatpush2.bf16.msra.mxu0 0
    %428 = vmatprep.subr.bf16.mxu0 0
    %429 = vmatpush2.bf16.msra.mxu0 0
    %430 = vmatprep.subr.bf16.mxu0 0
    %431 = vmatpush2.bf16.msra.mxu0 0
    %432 = vmatprep.subr.bf16.mxu0 0
    %433 = vmatpush2.bf16.msra.mxu0 0
    %434 = vmatprep.subr.bf16.mxu0 0
    %435 = vmatpush2.bf16.msra.mxu0 0
    %436 = vmatprep.subr.bf16.mxu0 0
    %437 = vmatpush2.bf16.msra.mxu0 0
    %438 = vmatprep.mubr.bf16.mxu0 0
    %439 = vmatmul.mubr.bf16.gmra.mxu0 %v334
    %v440 = vpop.f32.mrf.mxu0
    %v441 = vadd.f32 %v356, %v440
    %v442 = vpop.f32.mrf.mxu0
    %v443 = vpop.f32.mrf.mxu0
    %v444 = vpop.f32.mrf.mxu0
    %445 = vdwg.mxu0
    %446 = vst [vmem:[#allocation10] sm:$0xff] %v441
    // Predicated region
    $region54: #{tpu_custom_call.1} parent=1 // pred_check
      _
    $region55: #{tpu_custom_call.1} parent=1 // pred_check_branch
      %448 = sbr.rel (0) target = $region57
    $region56: #{tpu_custom_call.1} parent=1 // pred_region
      %s450 = ssub.s32 128, 128
      %451 = vsyncadd [#allocation4], %s450
      %s453 = sshll.u32 [#allocation10], 4
      %s454 = int_to_ptr.vmem [resolvable:$true] %s453
      %456 = dma.vmem_to_hbm [thread:$0]  %s454, 128, %s9, [#allocation4]
    $region57: #{tpu_custom_call.1} parent=1 // pred_fallthru
      _
    // Predicated region
    $region58: #{tpu_custom_call.1} parent=1 // pred_check
      _
    $region59: #{tpu_custom_call.1} parent=1 // pred_check_branch
      %458 = sbr.rel (0) target = $region61
    $region60: #{tpu_custom_call.1} parent=1 // pred_region
      %459 = dma.done [#allocation4], 128
    $region61: #{tpu_custom_call.1} parent=1 // pred_fallthru
      _
    %460 = vsyncpa [#allocation3], 1
    %461 = vsyncpa [#allocation6], 1
    %462 = vsyncpa [#allocation9], 1
    %463 = vsyncpa [#allocation4], 1

</llo_original>
